<compile_context>
chip_gen: v7x
topology: tpu7x:2x2x1
jax: 0.10.0
libtpu: 0.0.40
codegen_flags: <defaults>
</compile_context>

<pallas_src>
import jax
import jax.numpy as jnp
from jax.experimental import pallas as pl
from jax.experimental.pallas import tpu as pltpu


def mlp_kernel(xT_ref, w1_ref, b1_ref, w2_ref, b2_ref,
               w3_ref, b3_ref, w4_ref, b4_ref, oT_ref):
    """Fused 4-layer MLP on a transposed batch tile: h is [features, tile_b]."""
    h = xT_ref[...]                                                  # (D_in, tb)
    h = jnp.maximum(
        jnp.dot(w1_ref[...], h, preferred_element_type=jnp.float32)
        + b1_ref[...], 0.0)                                          # (128, tb)
    h = jnp.maximum(
        jnp.dot(w2_ref[...], h.astype(w2_ref.dtype),
                preferred_element_type=jnp.float32)
        + b2_ref[...], 0.0)                                          # (64, tb)
    h = jnp.maximum(
        jnp.dot(w3_ref[...], h.astype(w3_ref.dtype),
                preferred_element_type=jnp.float32)
        + b3_ref[...], 0.0)                                          # (32, tb)
    out = jnp.dot(w4_ref[...], h.astype(w4_ref.dtype),
                  preferred_element_type=jnp.float32) + b4_ref[...]  # (1, tb)
    oT_ref[...] = out.astype(oT_ref.dtype)


def mynet_forward(x, params, *, tile_b=512, compute_dtype=jnp.float32):
    """x: [B, D_in] float32. params: w1..w4 in PyTorch layout (out, in), b1..b4 (out, 1).

    Returns [B, 1] float32.  Set compute_dtype=jnp.bfloat16 on v6e/v7x for ~2x
    MXU throughput (accumulation stays f32); default f32 keeps 1e-5 accuracy.
    """
    B, D_in = x.shape
    tile_b = min(tile_b, B)                 # avoid an oversized single block
    grid = (pl.cdiv(B, tile_b),)

    # Transposed, lane-dense layout: batch on the last (lane) axis.
    xT = x.T.astype(compute_dtype)          # (D_in, B)
    w = [params[f"w{i}"].astype(compute_dtype) for i in range(1, 5)]
    b = [params[f"b{i}"].astype(jnp.float32) for i in range(1, 5)]   # bias/ReLU in f32

    def const_spec(a):
        nd = a.ndim
        # Whole-array block, same block for every grid step -> stays VMEM-resident.
        return pl.BlockSpec(a.shape, lambda i, _n=nd: (0,) * _n)

    outT = pl.pallas_call(
        mlp_kernel,
        out_shape=jax.ShapeDtypeStruct((1, B), jnp.float32),
        grid_spec=pltpu.PrefetchScalarGridSpec(
            num_scalar_prefetch=0,
            grid=grid,
            in_specs=[
                pl.BlockSpec((D_in, tile_b), lambda i: (0, i)),   # x tile (lane = batch)
                const_spec(w[0]), const_spec(b[0]),
                const_spec(w[1]), const_spec(b[1]),
                const_spec(w[2]), const_spec(b[2]),
                const_spec(w[3]), const_spec(b[3]),
            ],
            out_specs=pl.BlockSpec((1, tile_b), lambda i: (0, i)),  # lane-dense output
        ),
        compiler_params=pltpu.CompilerParams(
            dimension_semantics=("parallel",)),   # megacore split over batch tiles
    )(xT, w[0], b[0], w[1], b[1], w[2], b[2], w[3], b[3])

    return outT.T                                                    # (B, 1)


def init_params(key, d_in):
    """Deterministic init mimicking nn.Linear's U(-1/sqrt(fan_in), 1/sqrt(fan_in)).

    Weights stored in PyTorch layout (out_features, in_features); bias (out, 1).
    """
    dims = [(d_in, 128), (128, 64), (64, 32), (32, 1)]
    params = {}
    for idx, (fin, fout) in enumerate(dims, start=1):
        key, kw, kb = jax.random.split(key, 3)
        bound = 1.0 / jnp.sqrt(float(fin))
        params[f"w{idx}"] = jax.random.uniform(
            kw, (fout, fin), jnp.float32, -bound, bound)
        params[f"b{idx}"] = jax.random.uniform(
            kb, (fout, 1), jnp.float32, -bound, bound)
    return params


if __name__ == "__main__":
    key = jax.random.PRNGKey(0)
    # Small demo shapes; tile_b=128 with B=256 gives 2 grid steps (both v7x TCs).
    B, D_IN = 256, 64

    key, kx = jax.random.split(key)
    x = jax.random.normal(kx, (B, D_IN), jnp.float32)
    params = init_params(key, D_IN)

    out = mynet_forward(x, params, tile_b=128)
    out = jax.block_until_ready(out)

    # Pure-JAX reference (original batch-major layout, matches PyTorch semantics).
    h = jnp.maximum(x @ params["w1"].T + params["b1"].T, 0.0)
    h = jnp.maximum(h @ params["w2"].T + params["b2"].T, 0.0)
    h = jnp.maximum(h @ params["w3"].T + params["b3"].T, 0.0)
    ref = h @ params["w4"].T + params["b4"].T

    assert out.shape == (B, 1)
    assert jnp.allclose(out, ref, atol=1e-5, rtol=1e-5)

    print("KERNEL_OK")
</pallas_src>

<mosaic_0001>
module attributes {stable_mosaic.version = 11 : i64} {
  func.func @mlp_kernel(%arg0: i32, %arg1: memref<64x128xf32, #tpu.memory_space<vmem>>, %arg2: memref<128x64xf32, #tpu.memory_space<vmem>>, %arg3: memref<128x1xf32, #tpu.memory_space<vmem>>, %arg4: memref<64x128xf32, #tpu.memory_space<vmem>>, %arg5: memref<64x1xf32, #tpu.memory_space<vmem>>, %arg6: memref<32x64xf32, #tpu.memory_space<vmem>>, %arg7: memref<32x1xf32, #tpu.memory_space<vmem>>, %arg8: memref<1x32xf32, #tpu.memory_space<vmem>>, %arg9: memref<1x1xf32, #tpu.memory_space<vmem>>, %arg10: memref<1x128xf32, #tpu.memory_space<vmem>>) attributes {dimension_semantics = [#tpu.dimension_semantics<parallel>], iteration_bounds = array<i64: 2>, scalar_prefetch = 0 : i64, scratch_operands = 0 : i64, tpu.core_type = #tpu.core_type<tc>, window_params = [{transform_indices = @transform_0, window_bounds = array<i64: 64, 128>}, {pipeline_mode = #tpu.pipeline_mode<synchronous>, transform_indices = @transform_1, window_bounds = array<i64: 128, 64>}, {pipeline_mode = #tpu.pipeline_mode<synchronous>, transform_indices = @transform_2, window_bounds = array<i64: 128, 1>}, {pipeline_mode = #tpu.pipeline_mode<synchronous>, transform_indices = @transform_3, window_bounds = array<i64: 64, 128>}, {pipeline_mode = #tpu.pipeline_mode<synchronous>, transform_indices = @transform_4, window_bounds = array<i64: 64, 1>}, {pipeline_mode = #tpu.pipeline_mode<synchronous>, transform_indices = @transform_5, window_bounds = array<i64: 32, 64>}, {pipeline_mode = #tpu.pipeline_mode<synchronous>, transform_indices = @transform_6, window_bounds = array<i64: 32, 1>}, {pipeline_mode = #tpu.pipeline_mode<synchronous>, transform_indices = @transform_7, window_bounds = array<i64: 1, 32>}, {pipeline_mode = #tpu.pipeline_mode<synchronous>, transform_indices = @transform_8, window_bounds = array<i64: 1, 1>}, {transform_indices = @transform_9, window_bounds = array<i64: 1, 128>}]} {
    %c0 = arith.constant 0 : index
    %c0_0 = arith.constant 0 : index
    %0 = vector.load %arg1[%c0, %c0_0] : memref<64x128xf32, #tpu.memory_space<vmem>>, vector<64x128xf32>
    %c0_1 = arith.constant 0 : index
    %c0_2 = arith.constant 0 : index
    %1 = vector.load %arg2[%c0_1, %c0_2] : memref<128x64xf32, #tpu.memory_space<vmem>>, vector<128x64xf32>
    %cst = arith.constant dense<0.000000e+00> : vector<128x128xf32>
    %2 = tpu.matmul %1, %0, %cst {dimension_numbers = #tpu.dot_dimension_numbers<[1], [0], [0], [1], [0, 0, 1, 1], [], []>} : vector<128x64xf32>, vector<64x128xf32>, vector<128x128xf32> -> vector<128x128xf32>
    %c0_3 = arith.constant 0 : index
    %c0_4 = arith.constant 0 : index
    %3 = vector.load %arg3[%c0_3, %c0_4] : memref<128x1xf32, #tpu.memory_space<vmem>>, vector<128x1xf32>
    %4 = vector.broadcast %3 : vector<128x1xf32> to vector<128x128xf32>
    %5 = arith.addf %2, %4 : vector<128x128xf32>
    %cst_5 = arith.constant 0.000000e+00 : f32
    %6 = vector.broadcast %cst_5 : f32 to vector<128x128xf32>
    %7 = arith.maximumf %5, %6 : vector<128x128xf32>
    %c0_6 = arith.constant 0 : index
    %c0_7 = arith.constant 0 : index
    %8 = vector.load %arg4[%c0_6, %c0_7] : memref<64x128xf32, #tpu.memory_space<vmem>>, vector<64x128xf32>
    %cst_8 = arith.constant dense<0.000000e+00> : vector<64x128xf32>
    %9 = tpu.matmul %8, %7, %cst_8 {dimension_numbers = #tpu.dot_dimension_numbers<[1], [0], [0], [1], [0, 0, 1, 1], [], []>} : vector<64x128xf32>, vector<128x128xf32>, vector<64x128xf32> -> vector<64x128xf32>
    %c0_9 = arith.constant 0 : index
    %c0_10 = arith.constant 0 : index
    %10 = vector.load %arg5[%c0_9, %c0_10] : memref<64x1xf32, #tpu.memory_space<vmem>>, vector<64x1xf32>
    %11 = vector.broadcast %10 : vector<64x1xf32> to vector<64x128xf32>
    %12 = arith.addf %9, %11 : vector<64x128xf32>
    %cst_11 = arith.constant 0.000000e+00 : f32
    %13 = vector.broadcast %cst_11 : f32 to vector<64x128xf32>
    %14 = arith.maximumf %12, %13 : vector<64x128xf32>
    %c0_12 = arith.constant 0 : index
    %c0_13 = arith.constant 0 : index
    %15 = vector.load %arg6[%c0_12, %c0_13] : memref<32x64xf32, #tpu.memory_space<vmem>>, vector<32x64xf32>
    %cst_14 = arith.constant dense<0.000000e+00> : vector<32x128xf32>
    %16 = tpu.matmul %15, %14, %cst_14 {dimension_numbers = #tpu.dot_dimension_numbers<[1], [0], [0], [1], [0, 0, 1, 1], [], []>} : vector<32x64xf32>, vector<64x128xf32>, vector<32x128xf32> -> vector<32x128xf32>
    %c0_15 = arith.constant 0 : index
    %c0_16 = arith.constant 0 : index
    %17 = vector.load %arg7[%c0_15, %c0_16] : memref<32x1xf32, #tpu.memory_space<vmem>>, vector<32x1xf32>
    %18 = vector.broadcast %17 : vector<32x1xf32> to vector<32x128xf32>
    %19 = arith.addf %16, %18 : vector<32x128xf32>
    %cst_17 = arith.constant 0.000000e+00 : f32
    %20 = vector.broadcast %cst_17 : f32 to vector<32x128xf32>
    %21 = arith.maximumf %19, %20 : vector<32x128xf32>
    %c0_18 = arith.constant 0 : index
    %c0_19 = arith.constant 0 : index
    %22 = vector.load %arg8[%c0_18, %c0_19] : memref<1x32xf32, #tpu.memory_space<vmem>>, vector<1x32xf32>
    %cst_20 = arith.constant dense<0.000000e+00> : vector<1x128xf32>
    %23 = tpu.matmul %22, %21, %cst_20 {dimension_numbers = #tpu.dot_dimension_numbers<[1], [0], [0], [1], [0, 0, 1, 1], [], []>} : vector<1x32xf32>, vector<32x128xf32>, vector<1x128xf32> -> vector<1x128xf32>
    %c0_21 = arith.constant 0 : index
    %c0_22 = arith.constant 0 : index
    %24 = vector.load %arg9[%c0_21, %c0_22] : memref<1x1xf32, #tpu.memory_space<vmem>>, vector<1x1xf32>
    %25 = vector.broadcast %24 : vector<1x1xf32> to vector<1x128xf32>
    %26 = arith.addf %23, %25 : vector<1x128xf32>
    %c0_23 = arith.constant 0 : index
    %c0_24 = arith.constant 0 : index
    %27 = vector.load %arg10[%c0_23, %c0_24] : memref<1x128xf32, #tpu.memory_space<vmem>>, vector<1x128xf32>
    tpu.vector_store %arg10[%c0_23, %c0_24], %26 {strides = array<i32>} : memref<1x128xf32, #tpu.memory_space<vmem>>, vector<1x128xf32>,
    return
  }
  func.func @transform_0(%arg0: i32) -> (i32, i32) {
    %c0_i32 = arith.constant 0 : i32
    %c0_i32_0 = arith.constant 0 : i32
    return %c0_i32, %arg0 : i32, i32
  }
  func.func @transform_1(%arg0: i32) -> (i32, i32) {
    %c0_i32 = arith.constant 0 : i32
    %c0_i32_0 = arith.constant 0 : i32
    %c0_i32_1 = arith.constant 0 : i32
    return %c0_i32, %c0_i32_0 : i32, i32
  }
  func.func @transform_2(%arg0: i32) -> (i32, i32) {
    %c0_i32 = arith.constant 0 : i32
    %c0_i32_0 = arith.constant 0 : i32
    %c0_i32_1 = arith.constant 0 : i32
    return %c0_i32, %c0_i32_0 : i32, i32
  }
  func.func @transform_3(%arg0: i32) -> (i32, i32) {
    %c0_i32 = arith.constant 0 : i32
    %c0_i32_0 = arith.constant 0 : i32
    %c0_i32_1 = arith.constant 0 : i32
    return %c0_i32, %c0_i32_0 : i32, i32
  }
  func.func @transform_4(%arg0: i32) -> (i32, i32) {
    %c0_i32 = arith.constant 0 : i32
    %c0_i32_0 = arith.constant 0 : i32
    %c0_i32_1 = arith.constant 0 : i32
    return %c0_i32, %c0_i32_0 : i32, i32
  }
  func.func @transform_5(%arg0: i32) -> (i32, i32) {
    %c0_i32 = arith.constant 0 : i32
    %c0_i32_0 = arith.constant 0 : i32
    %c0_i32_1 = arith.constant 0 : i32
    return %c0_i32, %c0_i32_0 : i32, i32
  }
  func.func @transform_6(%arg0: i32) -> (i32, i32) {
    %c0_i32 = arith.constant 0 : i32
    %c0_i32_0 = arith.constant 0 : i32
    %c0_i32_1 = arith.constant 0 : i32
    return %c0_i32, %c0_i32_0 : i32, i32
  }
  func.func @transform_7(%arg0: i32) -> (i32, i32) {
    %c0_i32 = arith.constant 0 : i32
    %c0_i32_0 = arith.constant 0 : i32
    %c0_i32_1 = arith.constant 0 : i32
    return %c0_i32, %c0_i32_0 : i32, i32
  }
  func.func @transform_8(%arg0: i32) -> (i32, i32) {
    %c0_i32 = arith.constant 0 : i32
    %c0_i32_0 = arith.constant 0 : i32
    %c0_i32_1 = arith.constant 0 : i32
    return %c0_i32, %c0_i32_0 : i32, i32
  }
  func.func @transform_9(%arg0: i32) -> (i32, i32) {
    %c0_i32 = arith.constant 0 : i32
    %c0_i32_0 = arith.constant 0 : i32
    return %c0_i32, %arg0 : i32, i32
  }
}

</mosaic_0001>

<llo_original>
// kernel: tpu_custom_call.1
$region0: #{tpu_custom_call.1}
  #allocation0 [shape = 'u32[]', space=smem, size = 0x4, offset = 0x4, fixed_abs, tag = 'smem constant byte address 0x4 - core index']
  #allocation1 [shape = 'u32[144,128]{1,0:T(1,128)}', space=vmem, size = 0x12000, scoped, tag = 'internal scratch']
  #allocation2 [shape = 'f32[1,1]{1,0:T(1,128)S(1)}', space=vmem, size = 0x200, scoped, tag = 'scoped memory for tpu_custom_call.1']
  %s0 = inlined_call_operand.vmem [shape: f32[64,256], index: 0, kind: input, shape index: {}]
  %s1 = inlined_call_operand.vmem [shape: f32[128,64], index: 1, kind: input, shape index: {}]
  %s2 = inlined_call_operand.vmem [shape: f32[128,1], index: 2, kind: input, shape index: {}]
  %s3 = inlined_call_operand.vmem [shape: f32[64,128], index: 3, kind: input, shape index: {}]
  %s4 = inlined_call_operand.vmem [shape: f32[64,1], index: 4, kind: input, shape index: {}]
  %s5 = inlined_call_operand.vmem [shape: f32[32,64], index: 5, kind: input, shape index: {}]
  %s6 = inlined_call_operand.vmem [shape: f32[32,1], index: 6, kind: input, shape index: {}]
  %s7 = inlined_call_operand.vmem [shape: f32[1,32], index: 7, kind: input, shape index: {}]
  %s8 = inlined_call_operand.<no memory space> [shape: f32[1,1], index: 8, kind: input, shape index: {}]
  %s9 = inlined_call_operand.hbm [shape: f32[1,256], index: 9, kind: output, shape index: {}]
  %s10 = sld [smem:[#allocation0]]
  $region107: #{tpu_custom_call.1} parent=0
    _
  %s12 = ssub.s32 1, %s10
  %s13 = scalar_select 0, %s12, %s10
  %v14 = vstv %s8
  %15 = vst [vmem:[#allocation2] sm:$0x1] %v14
  $region1: #{tpu_custom_call.1} parent=0
    #allocation3 [shape = 'u8[65536]{0}', space=vmem, size = 0x10000, scoped, tag = 'input window, operand 0']
    #allocation4 [shape = 'u8[1024]{0}', space=vmem, size = 0x400, scoped, tag = 'output window, operand 0']
    #allocation5 [shape = 's32[2]{0}', space=sflag, size = 0x8, scoped, tag = 'scoped memory for tpu_custom_call.1']
    %16 = vsyncpa [#allocation5], 0
    %s17 = scalar_lea.sflag [#allocation5], 1
    %18 = vsyncpa %s17, 0
    loop: start=0, step=1, limit=4
    $region2: #{tpu_custom_call.1} parent=1 // loop_pre_header
      _
    $region3: #{tpu_custom_call.1} parent=1 // loop_header
      %s20 = sphi 0, %s24
      %p21 = scmp.ge.s32.totalorder %s20, 4
      %s30 = sphi 0, %s32
      %s33 = sphi 0, %s30
      %s34 = sphi 0, %s33
      %s50 = sphi 0, %s34
      %s54 = sphi 0, %s54
      %s56 = sphi 0, %s54
      %s57 = sphi 0, %s56
      %s71 = sphi 0, %s57
      %s75 = sphi 0, %s75
      %s77 = sphi 0, %s75
      %s78 = sphi 0, %s77
      %s92 = sphi 0, %s78
      %s96 = sphi 0, %s96
      %s98 = sphi 0, %s96
      %s99 = sphi 0, %s98
      %s113 = sphi 0, %s99
      %s117 = sphi 0, %s117
      %s119 = sphi 0, %s117
      %s120 = sphi 0, %s119
      %s134 = sphi 0, %s120
      %s138 = sphi 0, %s138
      %s140 = sphi 0, %s138
      %s141 = sphi 0, %s140
      %s155 = sphi 0, %s141
      %s159 = sphi 0, %s159
      %s161 = sphi 0, %s159
      %s162 = sphi 0, %s161
      %s176 = sphi 0, %s162
      %s180 = sphi 0, %s180
      %s182 = sphi 0, %s180
      %s183 = sphi 0, %s182
      %s197 = sphi 0, %s183
      %s201 = sphi 0, %s201
      %s203 = sphi 0, %s201
      %s204 = sphi 0, %s203
      %s218 = sphi 0, %s204
      %s224 = sphi 0, %s226
      %s227 = sphi 0, %s224
      %s228 = sphi 0, %s227
      %s244 = sphi 0, %s228
    $region4: #{tpu_custom_call.1} parent=1 // loop_header_branch
      %23 = sbr.rel (%p21) target = $region8
    $region5: #{tpu_custom_call.1} parent=1 // loop_body
      %s25 = ssub.s32 %s20, 1
      %s26 = ssub.s32 %s20, 2
      %s27 = sadd.s32 %s20, 1
      %s28 = ssub.s32 %s20, %s27
      %p29 = scmp.eq.s32.totalorder %s28, 0
      %s31 = sadd.s32 %s30, 1
      %s32 = scalar_select %p29, %s30, %s31
      %p35 = pneg %p29
      %p36 = scmp.eq.s32.totalorder %s20, 1
      %p37 = por %p35, %p36
      %p38 = scmp.ne.s32.totalorder %s30, %s33
      %p39 = scmp.eq.s32.totalorder %s20, 0
      %p40 = por %p38, %p39
      %p41 = scmp.ne.s32.totalorder %s30, %s33
      %p42 = scmp.eq.s32.totalorder %s25, 1
      %p43 = por %p41, %p42
      %p44 = scmp.ne.s32.totalorder %s33, %s34
      %p45 = scmp.eq.s32.totalorder %s25, 0
      %p46 = por %p44, %p45
      %p47 = scmp.ne.s32.totalorder %s33, %s34
      %p48 = scmp.eq.s32.totalorder %s26, 1
      %p49 = por %p47, %p48
      %p51 = scmp.ne.s32.totalorder %s34, %s50
      %p52 = scmp.eq.s32.totalorder %s26, 0
      %p53 = por %p51, %p52
      %s55 = sadd.s32 %s54, 1
      %p58 = scmp.eq.s32.totalorder %s20, 1
      %p59 = scmp.ne.s32.totalorder %s54, %s56
      %p60 = scmp.eq.s32.totalorder %s20, 0
      %p61 = por %p59, %p60
      %p62 = scmp.ne.s32.totalorder %s54, %s56
      %p63 = scmp.eq.s32.totalorder %s25, 1
      %p64 = por %p62, %p63
      %p65 = scmp.ne.s32.totalorder %s56, %s57
      %p66 = scmp.eq.s32.totalorder %s25, 0
      %p67 = por %p65, %p66
      %p68 = scmp.ne.s32.totalorder %s56, %s57
      %p69 = scmp.eq.s32.totalorder %s26, 1
      %p70 = por %p68, %p69
      %p72 = scmp.ne.s32.totalorder %s57, %s71
      %p73 = scmp.eq.s32.totalorder %s26, 0
      %p74 = por %p72, %p73
      %s76 = sadd.s32 %s75, 1
      %p79 = scmp.eq.s32.totalorder %s20, 1
      %p80 = scmp.ne.s32.totalorder %s75, %s77
      %p81 = scmp.eq.s32.totalorder %s20, 0
      %p82 = por %p80, %p81
      %p83 = scmp.ne.s32.totalorder %s75, %s77
      %p84 = scmp.eq.s32.totalorder %s25, 1
      %p85 = por %p83, %p84
      %p86 = scmp.ne.s32.totalorder %s77, %s78
      %p87 = scmp.eq.s32.totalorder %s25, 0
      %p88 = por %p86, %p87
      %p89 = scmp.ne.s32.totalorder %s77, %s78
      %p90 = scmp.eq.s32.totalorder %s26, 1
      %p91 = por %p89, %p90
      %p93 = scmp.ne.s32.totalorder %s78, %s92
      %p94 = scmp.eq.s32.totalorder %s26, 0
      %p95 = por %p93, %p94
      %s97 = sadd.s32 %s96, 1
      %p100 = scmp.eq.s32.totalorder %s20, 1
      %p101 = scmp.ne.s32.totalorder %s96, %s98
      %p102 = scmp.eq.s32.totalorder %s20, 0
      %p103 = por %p101, %p102
      %p104 = scmp.ne.s32.totalorder %s96, %s98
      %p105 = scmp.eq.s32.totalorder %s25, 1
      %p106 = por %p104, %p105
      %p107 = scmp.ne.s32.totalorder %s98, %s99
      %p108 = scmp.eq.s32.totalorder %s25, 0
      %p109 = por %p107, %p108
      %p110 = scmp.ne.s32.totalorder %s98, %s99
      %p111 = scmp.eq.s32.totalorder %s26, 1
      %p112 = por %p110, %p111
      %p114 = scmp.ne.s32.totalorder %s99, %s113
      %p115 = scmp.eq.s32.totalorder %s26, 0
      %p116 = por %p114, %p115
      %s118 = sadd.s32 %s117, 1
      %p121 = scmp.eq.s32.totalorder %s20, 1
      %p122 = scmp.ne.s32.totalorder %s117, %s119
      %p123 = scmp.eq.s32.totalorder %s20, 0
      %p124 = por %p122, %p123
      %p125 = scmp.ne.s32.totalorder %s117, %s119
      %p126 = scmp.eq.s32.totalorder %s25, 1
      %p127 = por %p125, %p126
      %p128 = scmp.ne.s32.totalorder %s119, %s120
      %p129 = scmp.eq.s32.totalorder %s25, 0
      %p130 = por %p128, %p129
      %p131 = scmp.ne.s32.totalorder %s119, %s120
      %p132 = scmp.eq.s32.totalorder %s26, 1
      %p133 = por %p131, %p132
      %p135 = scmp.ne.s32.totalorder %s120, %s134
      %p136 = scmp.eq.s32.totalorder %s26, 0
      %p137 = por %p135, %p136
      %s139 = sadd.s32 %s138, 1
      %p142 = scmp.eq.s32.totalorder %s20, 1
      %p143 = scmp.ne.s32.totalorder %s138, %s140
      %p144 = scmp.eq.s32.totalorder %s20, 0
      %p145 = por %p143, %p144
      %p146 = scmp.ne.s32.totalorder %s138, %s140
      %p147 = scmp.eq.s32.totalorder %s25, 1
      %p148 = por %p146, %p147
      %p149 = scmp.ne.s32.totalorder %s140, %s141
      %p150 = scmp.eq.s32.totalorder %s25, 0
      %p151 = por %p149, %p150
      %p152 = scmp.ne.s32.totalorder %s140, %s141
      %p153 = scmp.eq.s32.totalorder %s26, 1
      %p154 = por %p152, %p153
      %p156 = scmp.ne.s32.totalorder %s141, %s155
      %p157 = scmp.eq.s32.totalorder %s26, 0
      %p158 = por %p156, %p157
      %s160 = sadd.s32 %s159, 1
      %p163 = scmp.eq.s32.totalorder %s20, 1
      %p164 = scmp.ne.s32.totalorder %s159, %s161
      %p165 = scmp.eq.s32.totalorder %s20, 0
      %p166 = por %p164, %p165
      %p167 = scmp.ne.s32.totalorder %s159, %s161
      %p168 = scmp.eq.s32.totalorder %s25, 1
      %p169 = por %p167, %p168
      %p170 = scmp.ne.s32.totalorder %s161, %s162
      %p171 = scmp.eq.s32.totalorder %s25, 0
      %p172 = por %p170, %p171
      %p173 = scmp.ne.s32.totalorder %s161, %s162
      %p174 = scmp.eq.s32.totalorder %s26, 1
      %p175 = por %p173, %p174
      %p177 = scmp.ne.s32.totalorder %s162, %s176
      %p178 = scmp.eq.s32.totalorder %s26, 0
      %p179 = por %p177, %p178
      %s181 = sadd.s32 %s180, 1
      %p184 = scmp.eq.s32.totalorder %s20, 1
      %p185 = scmp.ne.s32.totalorder %s180, %s182
      %p186 = scmp.eq.s32.totalorder %s20, 0
      %p187 = por %p185, %p186
      %p188 = scmp.ne.s32.totalorder %s180, %s182
      %p189 = scmp.eq.s32.totalorder %s25, 1
      %p190 = por %p188, %p189
      %p191 = scmp.ne.s32.totalorder %s182, %s183
      %p192 = scmp.eq.s32.totalorder %s25, 0
      %p193 = por %p191, %p192
      %p194 = scmp.ne.s32.totalorder %s182, %s183
      %p195 = scmp.eq.s32.totalorder %s26, 1
      %p196 = por %p194, %p195
      %p198 = scmp.ne.s32.totalorder %s183, %s197
      %p199 = scmp.eq.s32.totalorder %s26, 0
      %p200 = por %p198, %p199
      %s202 = sadd.s32 %s201, 1
      %p205 = scmp.eq.s32.totalorder %s20, 1
      %p206 = scmp.ne.s32.totalorder %s201, %s203
      %p207 = scmp.eq.s32.totalorder %s20, 0
      %p208 = por %p206, %p207
      %p209 = scmp.ne.s32.totalorder %s201, %s203
      %p210 = scmp.eq.s32.totalorder %s25, 1
      %p211 = por %p209, %p210
      %p212 = scmp.ne.s32.totalorder %s203, %s204
      %p213 = scmp.eq.s32.totalorder %s25, 0
      %p214 = por %p212, %p213
      %p215 = scmp.ne.s32.totalorder %s203, %s204
      %p216 = scmp.eq.s32.totalorder %s26, 1
      %p217 = por %p215, %p216
      %p219 = scmp.ne.s32.totalorder %s204, %s218
      %p220 = scmp.eq.s32.totalorder %s26, 0
      %p221 = por %p219, %p220
      %s222 = ssub.s32 %s20, %s27
      %p223 = scmp.eq.s32.totalorder %s222, 0
      %s225 = sadd.s32 %s224, 1
      %s226 = scalar_select %p223, %s224, %s225
      %p229 = pneg %p223
      %p230 = scmp.eq.s32.totalorder %s20, 1
      %p231 = por %p229, %p230
      %p232 = scmp.ne.s32.totalorder %s224, %s227
      %p233 = scmp.eq.s32.totalorder %s20, 0
      %p234 = por %p232, %p233
      %p235 = scmp.ne.s32.totalorder %s224, %s227
      %p236 = scmp.eq.s32.totalorder %s25, 1
      %p237 = por %p235, %p236
      %p238 = scmp.ne.s32.totalorder %s227, %s228
      %p239 = scmp.eq.s32.totalorder %s25, 0
      %p240 = por %p238, %p239
      %p241 = scmp.ne.s32.totalorder %s227, %s228
      %p242 = scmp.eq.s32.totalorder %s26, 1
      %p243 = por %p241, %p242
      %p245 = scmp.ne.s32.totalorder %s228, %s244
      %p246 = scmp.eq.s32.totalorder %s26, 0
      %p247 = por %p245, %p246
      %p248 = scmp.le.s32.totalorder 1, %s20
      %p249 = scmp.lt.s32.totalorder %s20, 3
      %p250 = pnand %p248, %p249
      %p251 = pneg %p250
      // Predicated region
      $region9: #{tpu_custom_call.1} parent=5 // pred_check
        _
      $region10: #{tpu_custom_call.1} parent=5 // pred_check_branch
        %253 = sbr.rel (%p250) target = $region12
      $region11: #{tpu_custom_call.1} parent=5 // pred_region
        %s254 = ssub.s32 %s20, 1
        // Predicated region
        $region13: #{tpu_custom_call.1} parent=11 // pred_check
          %p255 = pneg %p67
        $region14: #{tpu_custom_call.1} parent=11 // pred_check_branch
          %257 = sbr.rel (%p255) target = $region16
        $region15: #{tpu_custom_call.1} parent=11 // pred_region
          _
        $region16: #{tpu_custom_call.1} parent=11 // pred_fallthru
          _
        // Predicated region
        $region17: #{tpu_custom_call.1} parent=11 // pred_check
          %p258 = pneg %p88
        $region18: #{tpu_custom_call.1} parent=11 // pred_check_branch
          %260 = sbr.rel (%p258) target = $region20
        $region19: #{tpu_custom_call.1} parent=11 // pred_region
          _
        $region20: #{tpu_custom_call.1} parent=11 // pred_fallthru
          _
        // Predicated region
        $region21: #{tpu_custom_call.1} parent=11 // pred_check
          %p261 = pneg %p109
        $region22: #{tpu_custom_call.1} parent=11 // pred_check_branch
          %263 = sbr.rel (%p261) target = $region24
        $region23: #{tpu_custom_call.1} parent=11 // pred_region
          _
        $region24: #{tpu_custom_call.1} parent=11 // pred_fallthru
          _
        // Predicated region
        $region25: #{tpu_custom_call.1} parent=11 // pred_check
          %p264 = pneg %p130
        $region26: #{tpu_custom_call.1} parent=11 // pred_check_branch
          %266 = sbr.rel (%p264) target = $region28
        $region27: #{tpu_custom_call.1} parent=11 // pred_region
          _
        $region28: #{tpu_custom_call.1} parent=11 // pred_fallthru
          _
        // Predicated region
        $region29: #{tpu_custom_call.1} parent=11 // pred_check
          %p267 = pneg %p151
        $region30: #{tpu_custom_call.1} parent=11 // pred_check_branch
          %269 = sbr.rel (%p267) target = $region32
        $region31: #{tpu_custom_call.1} parent=11 // pred_region
          _
        $region32: #{tpu_custom_call.1} parent=11 // pred_fallthru
          _
        // Predicated region
        $region33: #{tpu_custom_call.1} parent=11 // pred_check
          %p270 = pneg %p172
        $region34: #{tpu_custom_call.1} parent=11 // pred_check_branch
          %272 = sbr.rel (%p270) target = $region36
        $region35: #{tpu_custom_call.1} parent=11 // pred_region
          _
        $region36: #{tpu_custom_call.1} parent=11 // pred_fallthru
          _
        // Predicated region
        $region37: #{tpu_custom_call.1} parent=11 // pred_check
          %p273 = pneg %p193
        $region38: #{tpu_custom_call.1} parent=11 // pred_check_branch
          %275 = sbr.rel (%p273) target = $region40
        $region39: #{tpu_custom_call.1} parent=11 // pred_region
          _
        $region40: #{tpu_custom_call.1} parent=11 // pred_fallthru
          _
        // Predicated region
        $region41: #{tpu_custom_call.1} parent=11 // pred_check
          %p276 = pneg %p214
        $region42: #{tpu_custom_call.1} parent=11 // pred_check_branch
          %278 = sbr.rel (%p276) target = $region44
        $region43: #{tpu_custom_call.1} parent=11 // pred_region
          _
        $region44: #{tpu_custom_call.1} parent=11 // pred_fallthru
          _
      $region12: #{tpu_custom_call.1} parent=5 // pred_fallthru
        _
      %p279 = scmp.lt.s32.totalorder %s20, 2
      // Predicated region
      $region45: #{tpu_custom_call.1} parent=5 // pred_check
        %p280 = pneg %p279
      $region46: #{tpu_custom_call.1} parent=5 // pred_check_branch
        %282 = sbr.rel (%p280) target = $region48
      $region47: #{tpu_custom_call.1} parent=5 // pred_region
        // Predicated region
        $region49: #{tpu_custom_call.1} parent=47 // pred_check
          %p283 = pneg %p40
        $region50: #{tpu_custom_call.1} parent=47 // pred_check_branch
          %285 = sbr.rel (%p283) target = $region52
        $region51: #{tpu_custom_call.1} parent=47 // pred_region
          %s286 = sand.u32 %s30, 1
          %s287 = sand.u32 %s30, 1
          %s288 = smul.addr %s287, 64
          %s289 = scalar_lea.vmem [#allocation3], %s288
          %s290 = smul.addr %s20, 8
          %s291 = scalar_lea.vmem %s0, %s290
          // Predicated region
          $region53: #{tpu_custom_call.1} parent=51 // pred_check
            _
          $region54: #{tpu_custom_call.1} parent=51 // pred_check_branch
            %293 = sbr.rel (0) target = $region56
          $region55: #{tpu_custom_call.1} parent=51 // pred_region
            // Predicated region
            $region57: #{tpu_custom_call.1} parent=55 // pred_check
              _
            $region58: #{tpu_custom_call.1} parent=55 // pred_check_branch
              %295 = sbr.rel (0) target = $region60
            $region59: #{tpu_custom_call.1} parent=55 // pred_region
              // Predicated region
              $region72: #{tpu_custom_call.1} parent=59 // pred_check
                _
              $region73: #{tpu_custom_call.1} parent=59 // pred_check_branch
                %324 = sbr.rel (0) target = $region75
              $region74: #{tpu_custom_call.1} parent=59 // pred_region
                loop: start=0, step=1, limit=1
                $region76: #{tpu_custom_call.1} parent=74 // loop_pre_header
                  _
                $region77: #{tpu_custom_call.1} parent=74 // loop_header
                  %s326 = sphi 0, %s330
                  %p327 = scmp.ge.s32.totalorder %s326, 1
                  %s331 = sphi %s291, %s291
                  %s332 = sphi %s289, %s289
                $region78: #{tpu_custom_call.1} parent=74 // loop_header_branch
                  %329 = sbr.rel (%p327) target = $region82
                $region79: #{tpu_custom_call.1} parent=74 // loop_body
                  %v333 = vld [vmem:[%s331] sm:$0xff]
                  %334 = vst [vmem:[%s332] sm:$0xff] %v333
                  %v335 = vld [vmem:[%s331 + $0x10] sm:$0xff]
                  %336 = vst [vmem:[%s332 + $0x8] sm:$0xff] %v335
                  %v337 = vld [vmem:[%s331 + $0x20] sm:$0xff]
                  %338 = vst [vmem:[%s332 + $0x10] sm:$0xff] %v337
                  %v339 = vld [vmem:[%s331 + $0x30] sm:$0xff]
                  %340 = vst [vmem:[%s332 + $0x18] sm:$0xff] %v339
                  %v341 = vld [vmem:[%s331 + $0x40] sm:$0xff]
                  %342 = vst [vmem:[%s332 + $0x20] sm:$0xff] %v341
                  %v343 = vld [vmem:[%s331 + $0x50] sm:$0xff]
                  %344 = vst [vmem:[%s332 + $0x28] sm:$0xff] %v343
                  %v345 = vld [vmem:[%s331 + $0x60] sm:$0xff]
                  %346 = vst [vmem:[%s332 + $0x30] sm:$0xff] %v345
                  %v347 = vld [vmem:[%s331 + $0x70] sm:$0xff]
                  %348 = vst [vmem:[%s332 + $0x38] sm:$0xff] %v347
                $region80: #{tpu_custom_call.1} parent=74 // loop_footer
                  %s330 = sadd.s32 1, %s326
                $region81: #{tpu_custom_call.1} parent=74 // loop_footer_branch
                  %325 = sbr.rel target = $region77
                $region82: #{tpu_custom_call.1} parent=74 // loop_exit
                  _
              $region75: #{tpu_custom_call.1} parent=59 // pred_fallthru
                _
              // Predicated region
              $region83: #{tpu_custom_call.1} parent=59 // pred_check
                _
              $region84: #{tpu_custom_call.1} parent=59 // pred_check_branch
                %350 = sbr.rel target = $region86
              $region85: #{tpu_custom_call.1} parent=59 // pred_region
                _
              $region86: #{tpu_custom_call.1} parent=59 // pred_fallthru
                _
            $region60: #{tpu_custom_call.1} parent=55 // pred_fallthru
              _
            // Predicated region
            $region61: #{tpu_custom_call.1} parent=55 // pred_check
              _
            $region62: #{tpu_custom_call.1} parent=55 // pred_check_branch
              %297 = sbr.rel target = $region64
            $region63: #{tpu_custom_call.1} parent=55 // pred_region
              loop: start=0, step=1, limit=1
              $region65: #{tpu_custom_call.1} parent=63 // loop_pre_header
                _
              $region66: #{tpu_custom_call.1} parent=63 // loop_header
                %s300 = sphi 0, %s304
                %p301 = scmp.ge.s32.totalorder %s300, 1
                %s305 = sphi %s291, %s291
                %s306 = sphi %s289, %s289
              $region67: #{tpu_custom_call.1} parent=63 // loop_header_branch
                %303 = sbr.rel (%p301) target = $region71
              $region68: #{tpu_custom_call.1} parent=63 // loop_body
                %v307 = vld [vmem:[%s305] sm:$0xff]
                %308 = vst [vmem:[%s306] sm:$0xff] %v307
                %v309 = vld [vmem:[%s305 + $0x10] sm:$0xff]
                %310 = vst [vmem:[%s306 + $0x8] sm:$0xff] %v309
                %v311 = vld [vmem:[%s305 + $0x20] sm:$0xff]
                %312 = vst [vmem:[%s306 + $0x10] sm:$0xff] %v311
                %v313 = vld [vmem:[%s305 + $0x30] sm:$0xff]
                %314 = vst [vmem:[%s306 + $0x18] sm:$0xff] %v313
                %v315 = vld [vmem:[%s305 + $0x40] sm:$0xff]
                %316 = vst [vmem:[%s306 + $0x20] sm:$0xff] %v315
                %v317 = vld [vmem:[%s305 + $0x50] sm:$0xff]
                %318 = vst [vmem:[%s306 + $0x28] sm:$0xff] %v317
                %v319 = vld [vmem:[%s305 + $0x60] sm:$0xff]
                %320 = vst [vmem:[%s306 + $0x30] sm:$0xff] %v319
                %v321 = vld [vmem:[%s305 + $0x70] sm:$0xff]
                %322 = vst [vmem:[%s306 + $0x38] sm:$0xff] %v321
              $region69: #{tpu_custom_call.1} parent=63 // loop_footer
                %s304 = sadd.s32 1, %s300
              $region70: #{tpu_custom_call.1} parent=63 // loop_footer_branch
                %299 = sbr.rel target = $region66
              $region71: #{tpu_custom_call.1} parent=63 // loop_exit
                _
            $region64: #{tpu_custom_call.1} parent=55 // pred_fallthru
              _
          $region56: #{tpu_custom_call.1} parent=51 // pred_fallthru
            _
          %351 = vnop
        $region52: #{tpu_custom_call.1} parent=47 // pred_fallthru
          _
      $region48: #{tpu_custom_call.1} parent=5 // pred_fallthru
        _
      %p352 = scmp.le.s32.totalorder 1, %s20
      %p353 = scmp.lt.s32.totalorder %s20, 3
      %p354 = pnand %p352, %p353
      %p355 = pneg %p354
      // Predicated region
      $region87: #{tpu_custom_call.1} parent=5 // pred_check
        _
      $region88: #{tpu_custom_call.1} parent=5 // pred_check_branch
        %357 = sbr.rel (%p354) target = $region90
      $region89: #{tpu_custom_call.1} parent=5 // pred_region
        %s358 = ssub.s32 %s20, 1
        %s359 = sand.u32 %s33, 1
        %s360 = sand.u32 %s33, 1
        %s361 = smul.addr %s360, 64
        %s362 = scalar_lea.vmem [#allocation3], %s361
        // Predicated region
        $region91: #{tpu_custom_call.1} parent=89 // pred_check
          %p363 = pneg %p46
        $region92: #{tpu_custom_call.1} parent=89 // pred_check_branch
          %365 = sbr.rel (%p363) target = $region94
        $region93: #{tpu_custom_call.1} parent=89 // pred_region
          _
        $region94: #{tpu_custom_call.1} parent=89 // pred_fallthru
          _
        %s366 = sand.u32 %s33, 1
        %s367 = sand.u32 %s33, 1
        %s368 = smul.addr %s367, 64
        %s369 = scalar_lea.vmem [#allocation3], %s368
        %p370 = pneg %p46
        %p371 = pneg %p43
        %p372 = pneg %p67
        %p373 = pneg %p64
        %p374 = pneg %p88
        %p375 = pneg %p85
        %p376 = pneg %p109
        %p377 = pneg %p106
        %p378 = pneg %p130
        %p379 = pneg %p127
        %p380 = pneg %p151
        %p381 = pneg %p148
        %p382 = pneg %p172
        %p383 = pneg %p169
        %p384 = pneg %p193
        %p385 = pneg %p190
        %p386 = pneg %p214
        %p387 = pneg %p211
        %p388 = pneg %p240
        %p389 = pneg %p237
        %s390 = sand.u32 %s227, 1
        %s391 = scalar_lea.sflag [#allocation5], %s390
        %s392 = sand.u32 %s227, 1
        %s393 = scalar_lea.vmem [#allocation4], %s392
        %v394 = vld [vmem:[%s362] sm:$0xff]
        %v395 = vld [vmem:[%s362 + $0x8] sm:$0xff]
        %v396 = vld [vmem:[%s362 + $0x10] sm:$0xff]
        %v397 = vld [vmem:[%s362 + $0x18] sm:$0xff]
        %v398 = vld [vmem:[%s362 + $0x20] sm:$0xff]
        %v399 = vld [vmem:[%s362 + $0x28] sm:$0xff]
        %v400 = vld [vmem:[%s362 + $0x30] sm:$0xff]
        %v401 = vld [vmem:[%s362 + $0x38] sm:$0xff]
        %v402 = vld [vmem:[%s1] sm:$0xff]
        %v403 = vld [vmem:[%s1 + $0x8] sm:$0xff]
        %v404 = vld [vmem:[%s1 + $0x10] sm:$0xff]
        %v405 = vld [vmem:[%s1 + $0x18] sm:$0xff]
        %v406 = vld [vmem:[%s1 + $0x20] sm:$0xff]
        %v407 = vld [vmem:[%s1 + $0x28] sm:$0xff]
        %v408 = vld [vmem:[%s1 + $0x30] sm:$0xff]
        %v409 = vld [vmem:[%s1 + $0x38] sm:$0xff]
        %v410 = vld [vmem:[%s1 + $0x40] sm:$0xff]
        %v411 = vld [vmem:[%s1 + $0x48] sm:$0xff]
        %v412 = vld [vmem:[%s1 + $0x50] sm:$0xff]
        %v413 = vld [vmem:[%s1 + $0x58] sm:$0xff]
        %v414 = vld [vmem:[%s1 + $0x60] sm:$0xff]
        %v415 = vld [vmem:[%s1 + $0x68] sm:$0xff]
        %v416 = vld [vmem:[%s1 + $0x70] sm:$0xff]
        %v417 = vld [vmem:[%s1 + $0x78] sm:$0xff]
        %v418 = vld [vmem:[%s2] sm:$0xff]
        %v419 = vld [vmem:[%s2 + $0x8] sm:$0xff]
        %v420 = vld [vmem:[%s2 + $0x10] sm:$0xff]
        %v421 = vld [vmem:[%s2 + $0x18] sm:$0xff]
        %v422 = vld [vmem:[%s2 + $0x20] sm:$0xff]
        %v423 = vld [vmem:[%s2 + $0x28] sm:$0xff]
        %v424 = vld [vmem:[%s2 + $0x30] sm:$0xff]
        %v425 = vld [vmem:[%s2 + $0x38] sm:$0xff]
        %v426 = vld [vmem:[%s2 + $0x40] sm:$0xff]
        %v427 = vld [vmem:[%s2 + $0x48] sm:$0xff]
        %v428 = vld [vmem:[%s2 + $0x50] sm:$0xff]
        %v429 = vld [vmem:[%s2 + $0x58] sm:$0xff]
        %v430 = vld [vmem:[%s2 + $0x60] sm:$0xff]
        %v431 = vld [vmem:[%s2 + $0x68] sm:$0xff]
        %v432 = vld [vmem:[%s2 + $0x70] sm:$0xff]
        %v433 = vld [vmem:[%s2 + $0x78] sm:$0xff]
        %435 = vset.pattern.permute.xlu0 0
        %436 = vperm.xlu0 %435, %v418
        %v437 = vpop.permute.xlu0 %436
        %440 = vset.pattern.permute.xlu0 0
        %441 = vperm.xlu0 %440, %v419
        %v442 = vpop.permute.xlu0 %441
        %445 = vset.pattern.permute.xlu0 0
        %446 = vperm.xlu0 %445, %v420
        %v447 = vpop.permute.xlu0 %446
        %450 = vset.pattern.permute.xlu0 0
        %451 = vperm.xlu0 %450, %v421
        %v452 = vpop.permute.xlu0 %451
        %455 = vset.pattern.permute.xlu0 0
        %456 = vperm.xlu0 %455, %v422
        %v457 = vpop.permute.xlu0 %456
        %460 = vset.pattern.permute.xlu0 0
        %461 = vperm.xlu0 %460, %v423
        %v462 = vpop.permute.xlu0 %461
        %465 = vset.pattern.permute.xlu0 0
        %466 = vperm.xlu0 %465, %v424
        %v467 = vpop.permute.xlu0 %466
        %470 = vset.pattern.permute.xlu0 0
        %471 = vperm.xlu0 %470, %v425
        %v472 = vpop.permute.xlu0 %471
        %475 = vset.pattern.permute.xlu0 0
        %476 = vperm.xlu0 %475, %v426
        %v477 = vpop.permute.xlu0 %476
        %480 = vset.pattern.permute.xlu0 0
        %481 = vperm.xlu0 %480, %v427
        %v482 = vpop.permute.xlu0 %481
        %485 = vset.pattern.permute.xlu0 0
        %486 = vperm.xlu0 %485, %v428
        %v487 = vpop.permute.xlu0 %486
        %490 = vset.pattern.permute.xlu0 0
        %491 = vperm.xlu0 %490, %v429
        %v492 = vpop.permute.xlu0 %491
        %495 = vset.pattern.permute.xlu0 0
        %496 = vperm.xlu0 %495, %v430
        %v497 = vpop.permute.xlu0 %496
        %500 = vset.pattern.permute.xlu0 0
        %501 = vperm.xlu0 %500, %v431
        %v502 = vpop.permute.xlu0 %501
        %505 = vset.pattern.permute.xlu0 0
        %506 = vperm.xlu0 %505, %v432
        %v507 = vpop.permute.xlu0 %506
        %510 = vset.pattern.permute.xlu0 0
        %511 = vperm.xlu0 %510, %v433
        %v512 = vpop.permute.xlu0 %511
        %vm514 = vcmask 523264
        %v516 = vsel %vm514, %v402, 0
        %v519 = vsel %vm514, %v403, 0
        %v522 = vsel %vm514, %v404, 0
        %v525 = vsel %vm514, %v405, 0
        %v528 = vsel %vm514, %v406, 0
        %v531 = vsel %vm514, %v407, 0
        %v534 = vsel %vm514, %v408, 0
        %v537 = vsel %vm514, %v409, 0
        %v540 = vsel %vm514, %v410, 0
        %v543 = vsel %vm514, %v411, 0
        %v546 = vsel %vm514, %v412, 0
        %v549 = vsel %vm514, %v413, 0
        %v552 = vsel %vm514, %v414, 0
        %v555 = vsel %vm514, %v415, 0
        %v558 = vsel %vm514, %v416, 0
        %v561 = vsel %vm514, %v417, 0
        %563 = vmatprep.subr.mxu0 0.0
        %564 = vmatpush1.msra.mxu0 %v394
        %565 = vmatprep.subr.mxu0 0.0
        %566 = vmatpush1.msra.mxu0 %v395
        %567 = vmatprep.subr.mxu0 0.0
        %568 = vmatpush1.msra.mxu0 %v396
        %569 = vmatprep.subr.mxu0 0.0
        %570 = vmatpush1.msra.mxu0 %v397
        %571 = vmatprep.subr.mxu0 0.0
        %572 = vmatpush1.msra.mxu0 %v398
        %573 = vmatprep.subr.mxu0 0.0
        %574 = vmatpush1.msra.mxu0 %v399
        %575 = vmatprep.subr.mxu0 0.0
        %576 = vmatpush1.msra.mxu0 %v400
        %577 = vmatprep.subr.mxu0 0.0
        %578 = vmatpush1.msra.mxu0 %v401
        %579 = vmatprep.subr.mxu0 0.0
        %580 = vmatpush1.msra.mxu0 0.0
        %581 = vmatprep.subr.mxu0 0.0
        %582 = vmatpush1.msra.mxu0 0.0
        %583 = vmatprep.subr.mxu0 0.0
        %584 = vmatpush1.msra.mxu0 0.0
        %585 = vmatprep.subr.mxu0 0.0
        %586 = vmatpush1.msra.mxu0 0.0
        %587 = vmatprep.subr.mxu0 0.0
        %588 = vmatpush1.msra.mxu0 0.0
        %589 = vmatprep.subr.mxu0 0.0
        %590 = vmatpush1.msra.mxu0 0.0
        %591 = vmatprep.subr.mxu0 0.0
        %592 = vmatpush1.msra.mxu0 0.0
        %593 = vmatprep.subr.mxu0 0.0
        %594 = vmatpush1.msra.mxu0 0.0
        %595 = vmatprep.subr.mxu0 0.0
        %596 = vmatpush1.msra.mxu0 0.0
        %597 = vmatprep.subr.mxu0 0.0
        %598 = vmatpush1.msra.mxu0 0.0
        %599 = vmatprep.subr.mxu0 0.0
        %600 = vmatpush1.msra.mxu0 0.0
        %601 = vmatprep.subr.mxu0 0.0
        %602 = vmatpush1.msra.mxu0 0.0
        %603 = vmatprep.subr.mxu0 0.0
        %604 = vmatpush1.msra.mxu0 0.0
        %605 = vmatprep.subr.mxu0 0.0
        %606 = vmatpush1.msra.mxu0 0.0
        %607 = vmatprep.subr.mxu0 0.0
        %608 = vmatpush1.msra.mxu0 0.0
        %609 = vmatprep.subr.mxu0 0.0
        %610 = vmatpush1.msra.mxu0 0.0
        %611 = vmatprep.subr.mxu0 0.0
        %612 = vmatpush1.msra.mxu0 0.0
        %613 = vmatprep.subr.mxu0 0.0
        %614 = vmatpush1.msra.mxu0 0.0
        %615 = vmatprep.subr.mxu0 0.0
        %616 = vmatpush1.msra.mxu0 0.0
        %617 = vmatprep.subr.mxu0 0.0
        %618 = vmatpush1.msra.mxu0 0.0
        %619 = vmatprep.subr.mxu0 0.0
        %620 = vmatpush1.msra.mxu0 0.0
        %621 = vmatprep.subr.mxu0 0.0
        %622 = vmatpush1.msra.mxu0 0.0
        %623 = vmatprep.subr.mxu0 0.0
        %624 = vmatpush1.msra.mxu0 0.0
        %625 = vmatprep.subr.mxu0 0.0
        %626 = vmatpush1.msra.mxu0 0.0
        %627 = vmatprep.mubr.f32.mxu0 0.0
        %628 = vmatmul.mubr.f32.gmra.mrb[0].mxu0 %v516
        %v629 = vpop.f32.mrb[0].mxu0
        %v630 = vadd.f32 %v437, %v629
        %v631 = vpop.f32.mrb[0].mxu0
        %632 = vmatprep.mubr.f32.mxu0 0.0
        %633 = vmatmul.mubr.f32.gmra.mrb[0].mxu0 %v519
        %v634 = vpop.f32.mrb[0].mxu0
        %v635 = vadd.f32 %v442, %v634
        %v636 = vpop.f32.mrb[0].mxu0
        %637 = vmatprep.mubr.f32.mxu0 0.0
        %638 = vmatmul.mubr.f32.gmra.mrb[0].mxu0 %v522
        %v639 = vpop.f32.mrb[0].mxu0
        %v640 = vadd.f32 %v447, %v639
        %v641 = vpop.f32.mrb[0].mxu0
        %642 = vmatprep.mubr.f32.mxu0 0.0
        %643 = vmatmul.mubr.f32.gmra.mrb[0].mxu0 %v525
        %v644 = vpop.f32.mrb[0].mxu0
        %v645 = vadd.f32 %v452, %v644
        %v646 = vpop.f32.mrb[0].mxu0
        %647 = vmatprep.mubr.f32.mxu0 0.0
        %648 = vmatmul.mubr.f32.gmra.mrb[0].mxu0 %v528
        %v649 = vpop.f32.mrb[0].mxu0
        %v650 = vadd.f32 %v457, %v649
        %v651 = vpop.f32.mrb[0].mxu0
        %652 = vmatprep.mubr.f32.mxu0 0.0
        %653 = vmatmul.mubr.f32.gmra.mrb[0].mxu0 %v531
        %v654 = vpop.f32.mrb[0].mxu0
        %v655 = vadd.f32 %v462, %v654
        %v656 = vpop.f32.mrb[0].mxu0
        %657 = vmatprep.mubr.f32.mxu0 0.0
        %658 = vmatmul.mubr.f32.gmra.mrb[0].mxu0 %v534
        %v659 = vpop.f32.mrb[0].mxu0
        %v660 = vadd.f32 %v467, %v659
        %v661 = vpop.f32.mrb[0].mxu0
        %662 = vmatprep.mubr.f32.mxu0 0.0
        %663 = vmatmul.mubr.f32.gmra.mrb[0].mxu0 %v537
        %v664 = vpop.f32.mrb[0].mxu0
        %v665 = vadd.f32 %v472, %v664
        %v666 = vpop.f32.mrb[0].mxu0
        %667 = vmatprep.mubr.f32.mxu0 0.0
        %668 = vmatmul.mubr.f32.gmra.mrb[0].mxu0 %v540
        %v669 = vpop.f32.mrb[0].mxu0
        %v670 = vadd.f32 %v477, %v669
        %v671 = vpop.f32.mrb[0].mxu0
        %672 = vmatprep.mubr.f32.mxu0 0.0
        %673 = vmatmul.mubr.f32.gmra.mrb[0].mxu0 %v543
        %v674 = vpop.f32.mrb[0].mxu0
        %v675 = vadd.f32 %v482, %v674
        %v676 = vpop.f32.mrb[0].mxu0
        %677 = vmatprep.mubr.f32.mxu0 0.0
        %678 = vmatmul.mubr.f32.gmra.mrb[0].mxu0 %v546
        %v679 = vpop.f32.mrb[0].mxu0
        %v680 = vadd.f32 %v487, %v679
        %v681 = vpop.f32.mrb[0].mxu0
        %682 = vmatprep.mubr.f32.mxu0 0.0
        %683 = vmatmul.mubr.f32.gmra.mrb[0].mxu0 %v549
        %v684 = vpop.f32.mrb[0].mxu0
        %v685 = vadd.f32 %v492, %v684
        %v686 = vpop.f32.mrb[0].mxu0
        %687 = vmatprep.mubr.f32.mxu0 0.0
        %688 = vmatmul.mubr.f32.gmra.mrb[0].mxu0 %v552
        %v689 = vpop.f32.mrb[0].mxu0
        %v690 = vadd.f32 %v497, %v689
        %v691 = vpop.f32.mrb[0].mxu0
        %692 = vmatprep.mubr.f32.mxu0 0.0
        %693 = vmatmul.mubr.f32.gmra.mrb[0].mxu0 %v555
        %v694 = vpop.f32.mrb[0].mxu0
        %v695 = vadd.f32 %v502, %v694
        %v696 = vpop.f32.mrb[0].mxu0
        %697 = vmatprep.mubr.f32.mxu0 0.0
        %698 = vmatmul.mubr.f32.gmra.mrb[0].mxu0 %v558
        %v699 = vpop.f32.mrb[0].mxu0
        %v700 = vadd.f32 %v507, %v699
        %v701 = vpop.f32.mrb[0].mxu0
        %702 = vmatprep.mubr.f32.mxu0 0.0
        %703 = vmatmul.mubr.f32.gmra.mrb[0].mxu0 %v561
        %v704 = vpop.f32.mrb[0].mxu0
        %v705 = vadd.f32 %v512, %v704
        %v706 = vpop.f32.mrb[0].mxu0
        %707 = vdwg.mxu0
        %v708 = vmax.f32 %v630, 0.0
        %v709 = vmax.f32 %v635, 0.0
        %v710 = vmax.f32 %v640, 0.0
        %v711 = vmax.f32 %v645, 0.0
        %v712 = vmax.f32 %v650, 0.0
        %v713 = vmax.f32 %v655, 0.0
        %v714 = vmax.f32 %v660, 0.0
        %v715 = vmax.f32 %v665, 0.0
        %v716 = vmax.f32 %v670, 0.0
        %v717 = vmax.f32 %v675, 0.0
        %v718 = vmax.f32 %v680, 0.0
        %v719 = vmax.f32 %v685, 0.0
        %v720 = vmax.f32 %v690, 0.0
        %v721 = vmax.f32 %v695, 0.0
        %v722 = vmax.f32 %v700, 0.0
        %v723 = vmax.f32 %v705, 0.0
        %v724 = vld [vmem:[%s3] sm:$0xff]
        %v725 = vld [vmem:[%s3 + $0x8] sm:$0xff]
        %v726 = vld [vmem:[%s3 + $0x10] sm:$0xff]
        %v727 = vld [vmem:[%s3 + $0x18] sm:$0xff]
        %v728 = vld [vmem:[%s3 + $0x20] sm:$0xff]
        %v729 = vld [vmem:[%s3 + $0x28] sm:$0xff]
        %v730 = vld [vmem:[%s3 + $0x30] sm:$0xff]
        %v731 = vld [vmem:[%s3 + $0x38] sm:$0xff]
        %v732 = vld [vmem:[%s4] sm:$0xff]
        %v733 = vld [vmem:[%s4 + $0x8] sm:$0xff]
        %v734 = vld [vmem:[%s4 + $0x10] sm:$0xff]
        %v735 = vld [vmem:[%s4 + $0x18] sm:$0xff]
        %v736 = vld [vmem:[%s4 + $0x20] sm:$0xff]
        %v737 = vld [vmem:[%s4 + $0x28] sm:$0xff]
        %v738 = vld [vmem:[%s4 + $0x30] sm:$0xff]
        %v739 = vld [vmem:[%s4 + $0x38] sm:$0xff]
        %741 = vset.pattern.permute.xlu0 0
        %742 = vperm.xlu0 %741, %v732
        %v743 = vpop.permute.xlu0 %742
        %746 = vset.pattern.permute.xlu0 0
        %747 = vperm.xlu0 %746, %v733
        %v748 = vpop.permute.xlu0 %747
        %751 = vset.pattern.permute.xlu0 0
        %752 = vperm.xlu0 %751, %v734
        %v753 = vpop.permute.xlu0 %752
        %756 = vset.pattern.permute.xlu0 0
        %757 = vperm.xlu0 %756, %v735
        %v758 = vpop.permute.xlu0 %757
        %761 = vset.pattern.permute.xlu0 0
        %762 = vperm.xlu0 %761, %v736
        %v763 = vpop.permute.xlu0 %762
        %766 = vset.pattern.permute.xlu0 0
        %767 = vperm.xlu0 %766, %v737
        %v768 = vpop.permute.xlu0 %767
        %771 = vset.pattern.permute.xlu0 0
        %772 = vperm.xlu0 %771, %v738
        %v773 = vpop.permute.xlu0 %772
        %776 = vset.pattern.permute.xlu0 0
        %777 = vperm.xlu0 %776, %v739
        %v778 = vpop.permute.xlu0 %777
        %780 = vmatprep.subr.mxu0 0.0
        %781 = vmatpush1.msra.mxu0 %v708
        %782 = vmatprep.subr.mxu0 0.0
        %783 = vmatpush1.msra.mxu0 %v709
        %784 = vmatprep.subr.mxu0 0.0
        %785 = vmatpush1.msra.mxu0 %v710
        %786 = vmatprep.subr.mxu0 0.0
        %787 = vmatpush1.msra.mxu0 %v711
        %788 = vmatprep.subr.mxu0 0.0
        %789 = vmatpush1.msra.mxu0 %v712
        %790 = vmatprep.subr.mxu0 0.0
        %791 = vmatpush1.msra.mxu0 %v713
        %792 = vmatprep.subr.mxu0 0.0
        %793 = vmatpush1.msra.mxu0 %v714
        %794 = vmatprep.subr.mxu0 0.0
        %795 = vmatpush1.msra.mxu0 %v715
        %796 = vmatprep.subr.mxu0 0.0
        %797 = vmatpush1.msra.mxu0 %v716
        %798 = vmatprep.subr.mxu0 0.0
        %799 = vmatpush1.msra.mxu0 %v717
        %800 = vmatprep.subr.mxu0 0.0
        %801 = vmatpush1.msra.mxu0 %v718
        %802 = vmatprep.subr.mxu0 0.0
        %803 = vmatpush1.msra.mxu0 %v719
        %804 = vmatprep.subr.mxu0 0.0
        %805 = vmatpush1.msra.mxu0 %v720
        %806 = vmatprep.subr.mxu0 0.0
        %807 = vmatpush1.msra.mxu0 %v721
        %808 = vmatprep.subr.mxu0 0.0
        %809 = vmatpush1.msra.mxu0 %v722
        %810 = vmatprep.subr.mxu0 0.0
        %811 = vmatpush1.msra.mxu0 %v723
        %812 = vmatprep.subr.mxu0 0.0
        %813 = vmatpush1.msra.mxu0 0.0
        %814 = vmatprep.subr.mxu0 0.0
        %815 = vmatpush1.msra.mxu0 0.0
        %816 = vmatprep.subr.mxu0 0.0
        %817 = vmatpush1.msra.mxu0 0.0
        %818 = vmatprep.subr.mxu0 0.0
        %819 = vmatpush1.msra.mxu0 0.0
        %820 = vmatprep.subr.mxu0 0.0
        %821 = vmatpush1.msra.mxu0 0.0
        %822 = vmatprep.subr.mxu0 0.0
        %823 = vmatpush1.msra.mxu0 0.0
        %824 = vmatprep.subr.mxu0 0.0
        %825 = vmatpush1.msra.mxu0 0.0
        %826 = vmatprep.subr.mxu0 0.0
        %827 = vmatpush1.msra.mxu0 0.0
        %828 = vmatprep.subr.mxu0 0.0
        %829 = vmatpush1.msra.mxu0 0.0
        %830 = vmatprep.subr.mxu0 0.0
        %831 = vmatpush1.msra.mxu0 0.0
        %832 = vmatprep.subr.mxu0 0.0
        %833 = vmatpush1.msra.mxu0 0.0
        %834 = vmatprep.subr.mxu0 0.0
        %835 = vmatpush1.msra.mxu0 0.0
        %836 = vmatprep.subr.mxu0 0.0
        %837 = vmatpush1.msra.mxu0 0.0
        %838 = vmatprep.subr.mxu0 0.0
        %839 = vmatpush1.msra.mxu0 0.0
        %840 = vmatprep.subr.mxu0 0.0
        %841 = vmatpush1.msra.mxu0 0.0
        %842 = vmatprep.subr.mxu0 0.0
        %843 = vmatpush1.msra.mxu0 0.0
        %844 = vmatprep.mubr.f32.mxu0 0.0
        %845 = vmatmul.mubr.f32.gmra.mrb[0].mxu0 %v724
        %v846 = vpop.f32.mrb[0].mxu0
        %v847 = vadd.f32 %v743, %v846
        %v848 = vpop.f32.mrb[0].mxu0
        %849 = vmatprep.mubr.f32.mxu0 0.0
        %850 = vmatmul.mubr.f32.gmra.mrb[0].mxu0 %v725
        %v851 = vpop.f32.mrb[0].mxu0
        %v852 = vadd.f32 %v748, %v851
        %v853 = vpop.f32.mrb[0].mxu0
        %854 = vmatprep.mubr.f32.mxu0 0.0
        %855 = vmatmul.mubr.f32.gmra.mrb[0].mxu0 %v726
        %v856 = vpop.f32.mrb[0].mxu0
        %v857 = vadd.f32 %v753, %v856
        %v858 = vpop.f32.mrb[0].mxu0
        %859 = vmatprep.mubr.f32.mxu0 0.0
        %860 = vmatmul.mubr.f32.gmra.mrb[0].mxu0 %v727
        %v861 = vpop.f32.mrb[0].mxu0
        %v862 = vadd.f32 %v758, %v861
        %v863 = vpop.f32.mrb[0].mxu0
        %864 = vmatprep.mubr.f32.mxu0 0.0
        %865 = vmatmul.mubr.f32.gmra.mrb[0].mxu0 %v728
        %v866 = vpop.f32.mrb[0].mxu0
        %v867 = vadd.f32 %v763, %v866
        %v868 = vpop.f32.mrb[0].mxu0
        %869 = vmatprep.mubr.f32.mxu0 0.0
        %870 = vmatmul.mubr.f32.gmra.mrb[0].mxu0 %v729
        %v871 = vpop.f32.mrb[0].mxu0
        %v872 = vadd.f32 %v768, %v871
        %v873 = vpop.f32.mrb[0].mxu0
        %874 = vmatprep.mubr.f32.mxu0 0.0
        %875 = vmatmul.mubr.f32.gmra.mrb[0].mxu0 %v730
        %v876 = vpop.f32.mrb[0].mxu0
        %v877 = vadd.f32 %v773, %v876
        %v878 = vpop.f32.mrb[0].mxu0
        %879 = vmatprep.mubr.f32.mxu0 0.0
        %880 = vmatmul.mubr.f32.gmra.mrb[0].mxu0 %v731
        %v881 = vpop.f32.mrb[0].mxu0
        %v882 = vadd.f32 %v778, %v881
        %v883 = vpop.f32.mrb[0].mxu0
        %884 = vdwg.mxu0
        %v885 = vmax.f32 %v847, 0.0
        %v886 = vmax.f32 %v852, 0.0
        %v887 = vmax.f32 %v857, 0.0
        %v888 = vmax.f32 %v862, 0.0
        %v889 = vmax.f32 %v867, 0.0
        %v890 = vmax.f32 %v872, 0.0
        %v891 = vmax.f32 %v877, 0.0
        %v892 = vmax.f32 %v882, 0.0
        %v893 = vld [vmem:[%s5] sm:$0xff]
        %v894 = vld [vmem:[%s5 + $0x8] sm:$0xff]
        %v895 = vld [vmem:[%s5 + $0x10] sm:$0xff]
        %v896 = vld [vmem:[%s5 + $0x18] sm:$0xff]
        %v897 = vld [vmem:[%s6] sm:$0xff]
        %v898 = vld [vmem:[%s6 + $0x8] sm:$0xff]
        %v899 = vld [vmem:[%s6 + $0x10] sm:$0xff]
        %v900 = vld [vmem:[%s6 + $0x18] sm:$0xff]
        %902 = vset.pattern.permute.xlu0 0
        %903 = vperm.xlu0 %902, %v897
        %v904 = vpop.permute.xlu0 %903
        %907 = vset.pattern.permute.xlu0 0
        %908 = vperm.xlu0 %907, %v898
        %v909 = vpop.permute.xlu0 %908
        %912 = vset.pattern.permute.xlu0 0
        %913 = vperm.xlu0 %912, %v899
        %v914 = vpop.permute.xlu0 %913
        %917 = vset.pattern.permute.xlu0 0
        %918 = vperm.xlu0 %917, %v900
        %v919 = vpop.permute.xlu0 %918
        %v922 = vsel %vm514, %v893, 0
        %v925 = vsel %vm514, %v894, 0
        %v928 = vsel %vm514, %v895, 0
        %v931 = vsel %vm514, %v896, 0
        %933 = vmatprep.subr.mxu0 0.0
        %934 = vmatpush1.msra.mxu0 %v885
        %935 = vmatprep.subr.mxu0 0.0
        %936 = vmatpush1.msra.mxu0 %v886
        %937 = vmatprep.subr.mxu0 0.0
        %938 = vmatpush1.msra.mxu0 %v887
        %939 = vmatprep.subr.mxu0 0.0
        %940 = vmatpush1.msra.mxu0 %v888
        %941 = vmatprep.subr.mxu0 0.0
        %942 = vmatpush1.msra.mxu0 %v889
        %943 = vmatprep.subr.mxu0 0.0
        %944 = vmatpush1.msra.mxu0 %v890
        %945 = vmatprep.subr.mxu0 0.0
        %946 = vmatpush1.msra.mxu0 %v891
        %947 = vmatprep.subr.mxu0 0.0
        %948 = vmatpush1.msra.mxu0 %v892
        %949 = vmatprep.subr.mxu0 0.0
        %950 = vmatpush1.msra.mxu0 0.0
        %951 = vmatprep.subr.mxu0 0.0
        %952 = vmatpush1.msra.mxu0 0.0
        %953 = vmatprep.subr.mxu0 0.0
        %954 = vmatpush1.msra.mxu0 0.0
        %955 = vmatprep.subr.mxu0 0.0
        %956 = vmatpush1.msra.mxu0 0.0
        %957 = vmatprep.subr.mxu0 0.0
        %958 = vmatpush1.msra.mxu0 0.0
        %959 = vmatprep.subr.mxu0 0.0
        %960 = vmatpush1.msra.mxu0 0.0
        %961 = vmatprep.subr.mxu0 0.0
        %962 = vmatpush1.msra.mxu0 0.0
        %963 = vmatprep.subr.mxu0 0.0
        %964 = vmatpush1.msra.mxu0 0.0
        %965 = vmatprep.subr.mxu0 0.0
        %966 = vmatpush1.msra.mxu0 0.0
        %967 = vmatprep.subr.mxu0 0.0
        %968 = vmatpush1.msra.mxu0 0.0
        %969 = vmatprep.subr.mxu0 0.0
        %970 = vmatpush1.msra.mxu0 0.0
        %971 = vmatprep.subr.mxu0 0.0
        %972 = vmatpush1.msra.mxu0 0.0
        %973 = vmatprep.subr.mxu0 0.0
        %974 = vmatpush1.msra.mxu0 0.0
        %975 = vmatprep.subr.mxu0 0.0
        %976 = vmatpush1.msra.mxu0 0.0
        %977 = vmatprep.subr.mxu0 0.0
        %978 = vmatpush1.msra.mxu0 0.0
        %979 = vmatprep.subr.mxu0 0.0
        %980 = vmatpush1.msra.mxu0 0.0
        %981 = vmatprep.subr.mxu0 0.0
        %982 = vmatpush1.msra.mxu0 0.0
        %983 = vmatprep.subr.mxu0 0.0
        %984 = vmatpush1.msra.mxu0 0.0
        %985 = vmatprep.subr.mxu0 0.0
        %986 = vmatpush1.msra.mxu0 0.0
        %987 = vmatprep.subr.mxu0 0.0
        %988 = vmatpush1.msra.mxu0 0.0
        %989 = vmatprep.subr.mxu0 0.0
        %990 = vmatpush1.msra.mxu0 0.0
        %991 = vmatprep.subr.mxu0 0.0
        %992 = vmatpush1.msra.mxu0 0.0
        %993 = vmatprep.subr.mxu0 0.0
        %994 = vmatpush1.msra.mxu0 0.0
        %995 = vmatprep.subr.mxu0 0.0
        %996 = vmatpush1.msra.mxu0 0.0
        %997 = vmatprep.mubr.f32.mxu0 0.0
        %998 = vmatmul.mubr.f32.gmra.mrb[0].mxu0 %v922
        %v999 = vpop.f32.mrb[0].mxu0
        %v1000 = vadd.f32 %v904, %v999
        %v1001 = vpop.f32.mrb[0].mxu0
        %1002 = vmatprep.mubr.f32.mxu0 0.0
        %1003 = vmatmul.mubr.f32.gmra.mrb[0].mxu0 %v925
        %v1004 = vpop.f32.mrb[0].mxu0
        %v1005 = vadd.f32 %v909, %v1004
        %v1006 = vpop.f32.mrb[0].mxu0
        %1007 = vmatprep.mubr.f32.mxu0 0.0
        %1008 = vmatmul.mubr.f32.gmra.mrb[0].mxu0 %v928
        %v1009 = vpop.f32.mrb[0].mxu0
        %v1010 = vadd.f32 %v914, %v1009
        %v1011 = vpop.f32.mrb[0].mxu0
        %1012 = vmatprep.mubr.f32.mxu0 0.0
        %1013 = vmatmul.mubr.f32.gmra.mrb[0].mxu0 %v931
        %v1014 = vpop.f32.mrb[0].mxu0
        %v1015 = vadd.f32 %v919, %v1014
        %v1016 = vpop.f32.mrb[0].mxu0
        %1017 = vdwg.mxu0
        %v1018 = vmax.f32 %v1000, 0.0
        %v1019 = vmax.f32 %v1005, 0.0
        %v1020 = vmax.f32 %v1010, 0.0
        %v1021 = vmax.f32 %v1015, 0.0
        %v1022 = vld [vmem:[%s7] sm:$0x1]
        %v1023 = vld [vmem:[#allocation2] sm:$0x1]
        %1025 = vset.pattern.permute.xlu0 0
        %1026 = vperm.xlu0 %1025, %v1023
        %v1027 = vpop.permute.xlu0 %1026
        %v1029 = vlaneseq
        %v1030 = vshrl.u32 %v1029, 7
        %v1031 = vsub.s32 0, %v1030
        %v1032 = vrot.slane %v1027, %v1031
        %vm1033 = vcmask 261120
        %v1035 = vsel %vm1033, %v1022, 0
        %1037 = vmatprep.subr.mxu0 0.0
        %1038 = vmatpush1.msra.mxu0 %v1018
        %1039 = vmatprep.subr.mxu0 0.0
        %1040 = vmatpush1.msra.mxu0 %v1019
        %1041 = vmatprep.subr.mxu0 0.0
        %1042 = vmatpush1.msra.mxu0 %v1020
        %1043 = vmatprep.subr.mxu0 0.0
        %1044 = vmatpush1.msra.mxu0 %v1021
        %1045 = vmatprep.subr.mxu0 0.0
        %1046 = vmatpush1.msra.mxu0 0.0
        %1047 = vmatprep.subr.mxu0 0.0
        %1048 = vmatpush1.msra.mxu0 0.0
        %1049 = vmatprep.subr.mxu0 0.0
        %1050 = vmatpush1.msra.mxu0 0.0
        %1051 = vmatprep.subr.mxu0 0.0
        %1052 = vmatpush1.msra.mxu0 0.0
        %1053 = vmatprep.subr.mxu0 0.0
        %1054 = vmatpush1.msra.mxu0 0.0
        %1055 = vmatprep.subr.mxu0 0.0
        %1056 = vmatpush1.msra.mxu0 0.0
        %1057 = vmatprep.subr.mxu0 0.0
        %1058 = vmatpush1.msra.mxu0 0.0
        %1059 = vmatprep.subr.mxu0 0.0
        %1060 = vmatpush1.msra.mxu0 0.0
        %1061 = vmatprep.subr.mxu0 0.0
        %1062 = vmatpush1.msra.mxu0 0.0
        %1063 = vmatprep.subr.mxu0 0.0
        %1064 = vmatpush1.msra.mxu0 0.0
        %1065 = vmatprep.subr.mxu0 0.0
        %1066 = vmatpush1.msra.mxu0 0.0
        %1067 = vmatprep.subr.mxu0 0.0
        %1068 = vmatpush1.msra.mxu0 0.0
        %1069 = vmatprep.subr.mxu0 0.0
        %1070 = vmatpush1.msra.mxu0 0.0
        %1071 = vmatprep.subr.mxu0 0.0
        %1072 = vmatpush1.msra.mxu0 0.0
        %1073 = vmatprep.subr.mxu0 0.0
        %1074 = vmatpush1.msra.mxu0 0.0
        %1075 = vmatprep.subr.mxu0 0.0
        %1076 = vmatpush1.msra.mxu0 0.0
        %1077 = vmatprep.subr.mxu0 0.0
        %1078 = vmatpush1.msra.mxu0 0.0
        %1079 = vmatprep.subr.mxu0 0.0
        %1080 = vmatpush1.msra.mxu0 0.0
        %1081 = vmatprep.subr.mxu0 0.0
        %1082 = vmatpush1.msra.mxu0 0.0
        %1083 = vmatprep.subr.mxu0 0.0
        %1084 = vmatpush1.msra.mxu0 0.0
        %1085 = vmatprep.subr.mxu0 0.0
        %1086 = vmatpush1.msra.mxu0 0.0
        %1087 = vmatprep.subr.mxu0 0.0
        %1088 = vmatpush1.msra.mxu0 0.0
        %1089 = vmatprep.subr.mxu0 0.0
        %1090 = vmatpush1.msra.mxu0 0.0
        %1091 = vmatprep.subr.mxu0 0.0
        %1092 = vmatpush1.msra.mxu0 0.0
        %1093 = vmatprep.subr.mxu0 0.0
        %1094 = vmatpush1.msra.mxu0 0.0
        %1095 = vmatprep.subr.mxu0 0.0
        %1096 = vmatpush1.msra.mxu0 0.0
        %1097 = vmatprep.subr.mxu0 0.0
        %1098 = vmatpush1.msra.mxu0 0.0
        %1099 = vmatprep.subr.mxu0 0.0
        %1100 = vmatpush1.msra.mxu0 0.0
        %1101 = vmatprep.mubr.f32.mxu0 0.0
        %1102 = vmatmul.mubr.f32.gmra.mrb[0].mxu0 %v1035
        %v1103 = vpop.f32.mrb[0].mxu0
        %v1104 = vadd.f32 %v1032, %v1103
        %v1105 = vpop.f32.mrb[0].mxu0
        %1106 = vdwg.mxu0
        %1107 = vst [vmem:[%s393] sm:$0x1] %v1104
        %s1108 = sand.u32 %s227, 1
        %s1109 = scalar_lea.sflag [#allocation5], %s1108
        %s1110 = sand.u32 %s227, 1
        %s1111 = scalar_lea.vmem [#allocation4], %s1110
        // Predicated region
        $region95: #{tpu_custom_call.1} parent=89 // pred_check
          %p1112 = pneg %p237
        $region96: #{tpu_custom_call.1} parent=89 // pred_check_branch
          %1114 = sbr.rel (%p1112) target = $region98
        $region97: #{tpu_custom_call.1} parent=89 // pred_region
          %s1116 = ssub.s32 16, 16
          %1117 = vsyncadd %s1109, %s1116
          %s1118 = smul.addr %s25, 16
          %s1119 = scalar_lea.hbm %s9, %s1118
          %s1121 = sshll.u32 %s1111, 4
          %s1122 = int_to_ptr.vmem [resolvable:$true] %s1121
          %1124 = dma.vmem_to_hbm [thread:$0]  %s1122, 16, %s1119, %s1109
        $region98: #{tpu_custom_call.1} parent=89 // pred_fallthru
          _
      $region90: #{tpu_custom_call.1} parent=5 // pred_fallthru
        _
      %p1125 = scmp.le.s32.totalorder 2, %s20
      // Predicated region
      $region99: #{tpu_custom_call.1} parent=5 // pred_check
        %p1126 = pneg %p1125
      $region100: #{tpu_custom_call.1} parent=5 // pred_check_branch
        %1128 = sbr.rel (%p1126) target = $region102
      $region101: #{tpu_custom_call.1} parent=5 // pred_region
        %s1129 = ssub.s32 %s20, 2
        // Predicated region
        $region103: #{tpu_custom_call.1} parent=101 // pred_check
          %p1130 = pneg %p243
        $region104: #{tpu_custom_call.1} parent=101 // pred_check_branch
          %1132 = sbr.rel (%p1130) target = $region106
        $region105: #{tpu_custom_call.1} parent=101 // pred_region
          %s1133 = sand.u32 %s228, 1
          %s1134 = scalar_lea.sflag [#allocation5], %s1133
          %s1135 = sand.u32 %s228, 1
          %s1136 = scalar_lea.vmem [#allocation4], %s1135
          %1137 = dma.done %s1134, 16
        $region106: #{tpu_custom_call.1} parent=101 // pred_fallthru
          _
      $region102: #{tpu_custom_call.1} parent=5 // pred_fallthru
        _
    $region6: #{tpu_custom_call.1} parent=1 // loop_footer
      %s24 = sadd.s32 1, %s20
    $region7: #{tpu_custom_call.1} parent=1 // loop_footer_branch
      %19 = sbr.rel target = $region3
    $region8: #{tpu_custom_call.1} parent=1 // loop_exit
      _
    %1138 = vsyncpa [#allocation5], 1
    %s1139 = scalar_lea.sflag [#allocation5], 1
    %1140 = vsyncpa %s1139, 1

</llo_original>
